<compile_context>
chip_gen: v6e
topology: v6e:2x2x1
jax: 0.10.0
libtpu: 0.0.40
codegen_flags: <defaults>
</compile_context>

<pallas_src>
import functools

import jax
import jax.numpy as jnp
from jax.experimental import pallas as pl
from jax.experimental.pallas import tpu as pltpu


_LARGE_BYTES = 64 << 20   # split the copy into concurrent DMA slices above this
_MAX_SLICES = 8


def _slice_bounds(dim0: int, num_slices: int):
    """Static, roughly-equal (start, size) slices of the leading dimension."""
    num_slices = max(1, min(num_slices, dim0))
    base, rem = divmod(dim0, num_slices)
    bounds, start = [], 0
    for i in range(num_slices):
        size = base + (1 if i < rem else 0)
        if size == 0:
            continue
        bounds.append((start, size))
        start += size
    return tuple(bounds)


def _make_copy_kernel(slice_bounds):
    """HBM->HBM copy kernel: start all slice DMAs, then wait on all of them."""

    def kernel(x_hbm_ref, o_hbm_ref, copy_sems):
        copies = []
        for i, (start, size) in enumerate(slice_bounds):
            cp = pltpu.make_async_copy(
                x_hbm_ref.at[pl.ds(start, size)],
                o_hbm_ref.at[pl.ds(start, size)],
                copy_sems.at[i],
            )
            cp.start()
            copies.append(cp)
        for cp in copies:
            cp.wait()

    return kernel


@functools.partial(jax.jit, static_argnames=("slice_bounds",))
def _pallas_identity_copy(x: jax.Array, slice_bounds) -> jax.Array:
    """Forced HBM->HBM copy of x via direct DMA (no VMEM round trip)."""
    kernel = _make_copy_kernel(slice_bounds)
    return pl.pallas_call(
        kernel,
        out_shape=jax.ShapeDtypeStruct(x.shape, x.dtype),
        in_specs=[pl.BlockSpec(memory_space=pl.ANY)],
        out_specs=pl.BlockSpec(memory_space=pl.ANY),
        scratch_shapes=[pltpu.SemaphoreType.DMA((len(slice_bounds),))],
    )(x)


def dummy_layer_norm(x: jax.Array, *, force_copy: bool = False) -> jax.Array:
    """Pallas implementation of DummyLayerNorm.forward (identity).

    Default path returns x directly (zero bytes moved -- the optimal identity).
    With force_copy=True, produces a fresh output buffer via direct HBM->HBM DMA,
    splitting into concurrent slices for large arrays (v7x bandwidth headroom).
    """
    if not force_copy:
        return x  # identity: let XLA see it and fuse it away for free.

    nbytes = x.size * jnp.dtype(x.dtype).itemsize
    if x.ndim >= 1 and x.shape[0] >= 2 and nbytes >= _LARGE_BYTES:
        num_slices = min(_MAX_SLICES, x.shape[0])
    else:
        num_slices = 1

    if x.ndim == 0:
        # Degenerate scalar: no leading dim to slice; a copy is still just x.
        return _pallas_identity_copy(x.reshape(1), ((0, 1),)).reshape(())

    return _pallas_identity_copy(x, _slice_bounds(x.shape[0], num_slices))


if __name__ == "__main__":
    key = jax.random.PRNGKey(0)
    # (batch, seq, hidden) — layer-norm-style input.
    x = jax.random.normal(key, (2, 8, 32), dtype=jnp.float32)

    # Fast path (zero-copy identity) — the recommended production path.
    y_fast = dummy_layer_norm(x)
    # Forced-copy path — exercises the Pallas HBM->HBM DMA kernel on TPU.
    y_kernel = dummy_layer_norm(x, force_copy=True)
    y_fast, y_kernel = jax.block_until_ready((y_fast, y_kernel))

    assert y_fast.shape == x.shape and y_fast.dtype == x.dtype
    assert y_kernel.shape == x.shape and y_kernel.dtype == x.dtype
    assert bool(jnp.array_equal(y_fast, x)), "fast path must be identity"
    assert bool(jnp.array_equal(y_kernel, x)), "Pallas copy must be bitwise identity"
    print("KERNEL_OK")
</pallas_src>

<mosaic_0001>
module attributes {stable_mosaic.version = 11 : i64} {
  func.func @kernel(%arg0: memref<2x8x32xf32, #tpu.memory_space<any>>, %arg1: memref<2x8x32xf32, #tpu.memory_space<any>>, %arg2: memref<1x!tpu.dma_semaphore, #tpu.memory_space<semaphore_mem>>) attributes {dimension_semantics = [], scalar_prefetch = 0 : i64, scratch_operands = 1 : i64, tpu.core_type = #tpu.core_type<tc>} {
    %c0_i32 = arith.constant 0 : i32
    %c0_i32_0 = arith.constant 0 : i32
    %c0_i32_1 = arith.constant 0 : i32
    %c0_i32_2 = arith.constant 0 : i32
    %0 = tpu.memref_slice %arg0[%c0_i32_0, %c0_i32_1, %c0_i32_2] : memref<2x8x32xf32, #tpu.memory_space<any>> -> memref<2x8x32xf32, #tpu.memory_space<any>>
    %c0_i32_3 = arith.constant 0 : i32
    %c0_i32_4 = arith.constant 0 : i32
    %c0_i32_5 = arith.constant 0 : i32
    %1 = tpu.memref_slice %arg1[%c0_i32_3, %c0_i32_4, %c0_i32_5] : memref<2x8x32xf32, #tpu.memory_space<any>> -> memref<2x8x32xf32, #tpu.memory_space<any>>
    %2 = tpu.memref_slice %arg2[%c0_i32] : memref<1x!tpu.dma_semaphore, #tpu.memory_space<semaphore_mem>> -> memref<1x!tpu.dma_semaphore, #tpu.memory_space<semaphore_mem>>
    %3 = tpu.memref_squeeze %2 : memref<1x!tpu.dma_semaphore, #tpu.memory_space<semaphore_mem>> -> memref<!tpu.dma_semaphore, #tpu.memory_space<semaphore_mem>>
    tpu.enqueue_dma source(%0 : memref<2x8x32xf32, #tpu.memory_space<any>>) target(%1 : memref<2x8x32xf32, #tpu.memory_space<any>>) target_semaphore(%3 : memref<!tpu.dma_semaphore, #tpu.memory_space<semaphore_mem>>)
    %c0_i32_6 = arith.constant 0 : i32
    %c0_i32_7 = arith.constant 0 : i32
    %c0_i32_8 = arith.constant 0 : i32
    %c0_i32_9 = arith.constant 0 : i32
    %4 = tpu.memref_slice %arg0[%c0_i32_7, %c0_i32_8, %c0_i32_9] : memref<2x8x32xf32, #tpu.memory_space<any>> -> memref<2x8x32xf32, #tpu.memory_space<any>>
    %c0_i32_10 = arith.constant 0 : i32
    %c0_i32_11 = arith.constant 0 : i32
    %c0_i32_12 = arith.constant 0 : i32
    %5 = tpu.memref_slice %arg1[%c0_i32_10, %c0_i32_11, %c0_i32_12] : memref<2x8x32xf32, #tpu.memory_space<any>> -> memref<2x8x32xf32, #tpu.memory_space<any>>
    %6 = tpu.memref_slice %arg2[%c0_i32_6] : memref<1x!tpu.dma_semaphore, #tpu.memory_space<semaphore_mem>> -> memref<1x!tpu.dma_semaphore, #tpu.memory_space<semaphore_mem>>
    %7 = tpu.memref_squeeze %6 : memref<1x!tpu.dma_semaphore, #tpu.memory_space<semaphore_mem>> -> memref<!tpu.dma_semaphore, #tpu.memory_space<semaphore_mem>>
    tpu.wait_dma2 semaphore(%7 : memref<!tpu.dma_semaphore, #tpu.memory_space<semaphore_mem>>) src(%4 : memref<2x8x32xf32, #tpu.memory_space<any>>) dst(%5 : memref<2x8x32xf32, #tpu.memory_space<any>>)
    return
  }
}

</mosaic_0001>

<llo_original>
// kernel: _pallas_identity_copy.1
$region0: #{_pallas_identity_copy.1}
  #allocation0 [shape = 'u32[]', space=smem, size = 0x4, offset = 0x4, fixed_abs, tag = 'smem constant byte address 0x4 - core index']
  #allocation1 [shape = 'u32[144,128]{1,0:T(1,128)}', space=vmem, size = 0x12000, scoped, tag = 'internal scratch']
  #allocation2 [shape = 's32[1]{0}', space=sflag, size = 0x4, scoped, tag = 'scratch operand']
  #allocation3 [shape = 's32[]', space=sflag, size = 0x4, offset = 0, fixed_abs, tag = 'sflag constant byte address 0x0 - dummy sync flag']
  #allocation4 [shape = 'u32[0]{0}', space=smem, size = 0, offset = 0, fixed_abs, tag = 'smem constant byte address 0x0 - null']
  %s0 = inlined_call_operand.hbm [shape: f32[2,8,32], index: 0, kind: input, shape index: {}]
  %s1 = inlined_call_operand.hbm [shape: f32[2,8,32], index: 1, kind: output, shape index: {}]
  %s2 = sld [smem:[#allocation0]]
  $region2: #{_pallas_identity_copy.1} parent=0
    _
  %s4 = ssub.s32 1, %s2
  %s5 = scalar_select 0, %s4, %s2
  %s7 = sshll.u32 1, 14
  %s8 = sxor.u32 4294967295, %s7
  %12 = dma.general %s0, 256, %s1, [#allocation2], 131072, [#allocation4], 0, 0
  %s13 = smul.u32 2, 8
  %s14 = smul.u32 %s13, 1
  %s15 = sshll.u32 %s14, 4
  %16 = dma.done [#allocation2], %s15
  %17 = vsyncmov [#allocation2]
  %s18 = vpop.sfrf %17
  %p19 = scmp.eq.s32.totalorder %s18, 0
  %p20 = pneg %p19
  %22 = shalt.err (%p20)

</llo_original>
